<compile_context>
chip_gen: v7x
topology: tpu7x:2x2x1
jax: 0.10.0
libtpu: 0.0.40
codegen_flags: <defaults>
</compile_context>

<pallas_src>
from functools import partial

import jax
import jax.numpy as jnp
from jax import lax
from jax.experimental import pallas as pl
from jax.experimental.pallas import tpu as pltpu

LEAKY_SLOPE = 0.01   # nn.LeakyReLU default
LN_EPS = 1e-5        # nn.LayerNorm default


def _round_up(x, m):
    return ((x + m - 1) // m) * m


def _choose_tile(n_rows, requested):
    """Row tile: as large as requested (multiple of 8), but keep >=2 grid steps
    when there is enough work so the row axis can shard across v7x's 2 TCs."""
    tile = max(8, min(_round_up(requested, 8), _round_up(n_rows, 8)))
    if n_rows > 8 and _round_up(n_rows, tile) // tile < 2:
        tile = max(8, _round_up((n_rows + 1) // 2, 8))
    return tile


def projector_kernel(x_ref, w_in_ref, b_in_ref, g_ref, be_ref,
                     w_out_ref, b_out_ref, o_ref):
    """Fused: x @ [W1|W3] -> LeakyReLU -> per-half LayerNorm -> @ [W2;W4] + (b2+b4)."""
    two_h = w_in_ref.shape[1]
    half = two_h // 2
    inv_half = 1.0 / float(half)

    x = x_ref[...].astype(jnp.float32)

    # Single fused input matmul (both branches side by side in the lane dim).
    h = jnp.dot(x, w_in_ref[...], preferred_element_type=jnp.float32) + b_in_ref[...]
    h = jnp.where(h >= 0.0, h, LEAKY_SLOPE * h)

    # Per-branch (per-half) LayerNorm using lane masks — no value reshapes/slices.
    lane = lax.broadcasted_iota(jnp.int32, (1, two_h), 1)
    m1 = (lane < half).astype(jnp.float32)          # [1, 2H] first-half mask
    m2 = 1.0 - m1                                   # [1, 2H] second-half mask

    mu1 = jnp.sum(h * m1, axis=-1, keepdims=True) * inv_half
    mu2 = jnp.sum(h * m2, axis=-1, keepdims=True) * inv_half
    mu = m1 * mu1 + m2 * mu2                        # per-lane correct mean

    d = h - mu
    d2 = d * d
    v1 = jnp.sum(d2 * m1, axis=-1, keepdims=True) * inv_half   # biased, like torch
    v2 = jnp.sum(d2 * m2, axis=-1, keepdims=True) * inv_half
    inv_std = m1 * lax.rsqrt(v1 + LN_EPS) + m2 * lax.rsqrt(v2 + LN_EPS)

    hn = d * inv_std * g_ref[...] + be_ref[...]

    # Single fused output matmul; summing the two branches == stacked weights.
    out = jnp.dot(hn, w_out_ref[...], preferred_element_type=jnp.float32) + b_out_ref[...]
    o_ref[...] = out.astype(o_ref.dtype)


def projector_forward(X, z0, input_uncertainty, params, *, tile_rows=512):
    """X: [T, B, latent_dim], z0: [B, latent_dim], input_uncertainty: [T, B, num_bands].
    Returns [T, B, 2 * num_bands]."""
    T, B, _ = X.shape
    # include_latent=True: cat latent trajectory with repeated z0, then uncertainty.
    z0_rep = jnp.broadcast_to(z0[None, :, :], (T, B, z0.shape[-1]))
    Xc = jnp.concatenate([X, z0_rep, input_uncertainty], axis=2)   # [T, B, dim_in]
    dim_in = Xc.shape[-1]

    # Pack the two branches once in the wrapper (not per grid step in the kernel).
    w_in = jnp.concatenate([params["w1"], params["w3"]], axis=1)    # [dim_in, 2H]
    b_in = jnp.concatenate([params["b1"], params["b3"]], axis=1)    # [1, 2H]
    gamma = jnp.concatenate([params["g1"], params["g3"]], axis=1)   # [1, 2H]
    beta = jnp.concatenate([params["be1"], params["be3"]], axis=1)  # [1, 2H]
    w_out = jnp.concatenate([params["w2"], params["w4"]], axis=0)   # [2H, dim_out]
    b_out = params["b2"] + params["b4"]                             # [1, dim_out]
    two_h = w_in.shape[1]
    dim_out = w_out.shape[-1]

    # Flatten tokens; choose a large row tile and pad rows to a multiple of it.
    N = T * B
    tile = _choose_tile(N, tile_rows)
    N_pad = _round_up(N, tile)
    x2d = Xc.reshape(N, dim_in)
    if N_pad != N:
        x2d = jnp.pad(x2d, ((0, N_pad - N), (0, 0)))

    param_vals = [w_in, b_in, gamma, beta, w_out, b_out]
    param_specs = [pl.BlockSpec(p.shape, lambda i: (0, 0)) for p in param_vals]

    param_bytes = sum(int(p.size) for p in param_vals) * 4
    cost = pl.CostEstimate(
        flops=2 * N_pad * (dim_in * two_h + two_h * dim_out),
        transcendentals=2 * N_pad,                                  # two rsqrt / token
        bytes_accessed=4 * N_pad * (dim_in + dim_out) + param_bytes,
    )

    out = pl.pallas_call(
        projector_kernel,
        out_shape=jax.ShapeDtypeStruct((N_pad, dim_out), X.dtype),
        grid_spec=pltpu.PrefetchScalarGridSpec(
            num_scalar_prefetch=0,
            grid=(N_pad // tile,),
            in_specs=[pl.BlockSpec((tile, dim_in), lambda i: (i, 0))] + param_specs,
            out_specs=pl.BlockSpec((tile, dim_out), lambda i: (i, 0)),
        ),
        compiler_params=pltpu.CompilerParams(dimension_semantics=("parallel",)),
        cost_estimate=cost,
    )(x2d, *param_vals)

    return out[:N].reshape(T, B, dim_out)


def init_params(key, latent_dim, num_bands, dim_hidden=64):
    """Parameter init mimicking PyTorch defaults (uniform +/- 1/sqrt(fan_in),
    LayerNorm weight=1 bias=0).  Biases/affines stored as [1, D] rows for TPU layout."""
    dim_in = 2 * latent_dim + num_bands   # include_latent=True
    dim_out = 2 * num_bands               # uncertainty_output=True

    def linear(k, fan_in, fan_out):
        kw, kb = jax.random.split(k)
        bound = 1.0 / jnp.sqrt(fan_in)
        w = jax.random.uniform(kw, (fan_in, fan_out), jnp.float32, -bound, bound)
        b = jax.random.uniform(kb, (1, fan_out), jnp.float32, -bound, bound)
        return w, b

    k1, k2, k3, k4 = jax.random.split(key, 4)
    w1, b1 = linear(k1, dim_in, dim_hidden)      # lin_skip[0]
    w2, b2 = linear(k2, dim_hidden, dim_out)     # lin_skip[4]
    w3, b3 = linear(k3, dim_in, dim_hidden)      # layers[0]
    w4, b4 = linear(k4, dim_hidden, dim_out)     # layers[-1]
    ones = jnp.ones((1, dim_hidden), jnp.float32)
    zeros = jnp.zeros((1, dim_hidden), jnp.float32)
    return dict(w1=w1, b1=b1, g1=ones, be1=zeros, w2=w2, b2=b2,
                w3=w3, b3=b3, g3=ones, be3=zeros, w4=w4, b4=b4)


def projector_reference(X, z0, input_uncertainty, params):
    """Pure-JAX reference of the PyTorch forward pass (unfused, branch-by-branch)."""
    T, B, _ = X.shape
    z0_rep = jnp.broadcast_to(z0[None], (T, B, z0.shape[-1]))
    x = jnp.concatenate([X, z0_rep, input_uncertainty], axis=2)
    x = jnp.transpose(x, (1, 0, 2))

    def branch(x, w_a, b_a, g, be, w_b, b_b):
        h = x @ w_a + b_a
        h = jnp.where(h >= 0, h, LEAKY_SLOPE * h)
        mu = jnp.mean(h, axis=-1, keepdims=True)
        var = jnp.mean((h - mu) ** 2, axis=-1, keepdims=True)
        h = (h - mu) / jnp.sqrt(var + LN_EPS) * g + be
        return h @ w_b + b_b

    p = params
    skip = branch(x, p["w1"], p["b1"], p["g1"], p["be1"], p["w2"], p["b2"])
    main = branch(x, p["w3"], p["b3"], p["g3"], p["be3"], p["w4"], p["b4"])
    return jnp.transpose(main + skip, (1, 0, 2))


if __name__ == "__main__":
    T, B = 8, 2
    latent_dim, num_bands, dim_hidden = 4, 2, 64

    key = jax.random.PRNGKey(0)
    kx, kz, ku, kp = jax.random.split(key, 4)
    X = jax.random.normal(kx, (T, B, latent_dim), jnp.float32)
    z0 = jax.random.normal(kz, (B, latent_dim), jnp.float32)
    input_uncertainty = jax.random.normal(ku, (T, B, num_bands), jnp.float32)
    params = init_params(kp, latent_dim, num_bands, dim_hidden)

    out = projector_forward(X, z0, input_uncertainty, params)
    out = jax.block_until_ready(out)

    ref = projector_reference(X, z0, input_uncertainty, params)
    assert out.shape == (T, B, 2 * num_bands)
    assert jnp.max(jnp.abs(out - ref)) < 1e-4

    print("KERNEL_OK")
</pallas_src>

<mosaic_0001>
module attributes {stable_mosaic.version = 11 : i64} {
  func.func @projector_kernel(%arg0: i32, %arg1: memref<8x10xf32, #tpu.memory_space<vmem>>, %arg2: memref<10x128xf32, #tpu.memory_space<vmem>>, %arg3: memref<1x128xf32, #tpu.memory_space<vmem>>, %arg4: memref<1x128xf32, #tpu.memory_space<vmem>>, %arg5: memref<1x128xf32, #tpu.memory_space<vmem>>, %arg6: memref<128x4xf32, #tpu.memory_space<vmem>>, %arg7: memref<1x4xf32, #tpu.memory_space<vmem>>, %arg8: memref<8x4xf32, #tpu.memory_space<vmem>>) attributes {dimension_semantics = [#tpu.dimension_semantics<parallel>], iteration_bounds = array<i64: 2>, scalar_prefetch = 0 : i64, scratch_operands = 0 : i64, tpu.core_type = #tpu.core_type<tc>, window_params = [{transform_indices = @transform_0, window_bounds = array<i64: 8, 10>}, {pipeline_mode = #tpu.pipeline_mode<synchronous>, transform_indices = @transform_1, window_bounds = array<i64: 10, 128>}, {pipeline_mode = #tpu.pipeline_mode<synchronous>, transform_indices = @transform_2, window_bounds = array<i64: 1, 128>}, {pipeline_mode = #tpu.pipeline_mode<synchronous>, transform_indices = @transform_3, window_bounds = array<i64: 1, 128>}, {pipeline_mode = #tpu.pipeline_mode<synchronous>, transform_indices = @transform_4, window_bounds = array<i64: 1, 128>}, {pipeline_mode = #tpu.pipeline_mode<synchronous>, transform_indices = @transform_5, window_bounds = array<i64: 128, 4>}, {pipeline_mode = #tpu.pipeline_mode<synchronous>, transform_indices = @transform_6, window_bounds = array<i64: 1, 4>}, {transform_indices = @transform_7, window_bounds = array<i64: 8, 4>}]} {
    %c0 = arith.constant 0 : index
    %c0_0 = arith.constant 0 : index
    %0 = vector.load %arg1[%c0, %c0_0] : memref<8x10xf32, #tpu.memory_space<vmem>>, vector<8x10xf32>
    %c0_1 = arith.constant 0 : index
    %c0_2 = arith.constant 0 : index
    %1 = vector.load %arg2[%c0_1, %c0_2] : memref<10x128xf32, #tpu.memory_space<vmem>>, vector<10x128xf32>
    %cst = arith.constant dense<0.000000e+00> : vector<8x128xf32>
    %2 = tpu.matmul %0, %1, %cst {dimension_numbers = #tpu.dot_dimension_numbers<[1], [0], [0], [1], [0, 0, 1, 1], [], []>} : vector<8x10xf32>, vector<10x128xf32>, vector<8x128xf32> -> vector<8x128xf32>
    %c0_3 = arith.constant 0 : index
    %c0_4 = arith.constant 0 : index
    %3 = vector.load %arg3[%c0_3, %c0_4] : memref<1x128xf32, #tpu.memory_space<vmem>>, vector<1x128xf32>
    %4 = vector.broadcast %3 : vector<1x128xf32> to vector<8x128xf32>
    %5 = arith.addf %2, %4 : vector<8x128xf32>
    %cst_5 = arith.constant 0.000000e+00 : f32
    %6 = vector.broadcast %cst_5 : f32 to vector<8x128xf32>
    %7 = arith.cmpf oge, %5, %6 : vector<8x128xf32>
    %cst_6 = arith.constant 0.00999999977 : f32
    %8 = vector.broadcast %cst_6 : f32 to vector<8x128xf32>
    %9 = arith.mulf %8, %5 : vector<8x128xf32>
    %10 = arith.select %7, %5, %9 : vector<8x128xi1>, vector<8x128xf32>
    %11 = tpu.iota {dimensions = array<i32: 1>} : vector<1x128xi32>
    %c64_i32 = arith.constant 64 : i32
    %12 = vector.broadcast %c64_i32 : i32 to vector<1x128xi32>
    %13 = arith.cmpi slt, %11, %12 : vector<1x128xi32>
    %14 = arith.extui %13 : vector<1x128xi1> to vector<1x128xi32>
    %15 = arith.sitofp %14 : vector<1x128xi32> to vector<1x128xf32>
    %cst_7 = arith.constant 1.000000e+00 : f32
    %16 = vector.broadcast %cst_7 : f32 to vector<1x128xf32>
    %17 = arith.subf %16, %15 : vector<1x128xf32>
    %18 = vector.broadcast %15 : vector<1x128xf32> to vector<8x128xf32>
    %19 = arith.mulf %10, %18 : vector<8x128xf32>
    %cst_8 = arith.constant dense<0.000000e+00> : vector<8xf32>
    %20 = vector.multi_reduction <add>, %19, %cst_8 [1] : vector<8x128xf32> to vector<8xf32>
    %21 = vector.shape_cast %20 : vector<8xf32> to vector<8x1xf32>
    %cst_9 = arith.constant 1.562500e-02 : f32
    %22 = vector.broadcast %cst_9 : f32 to vector<8x1xf32>
    %23 = arith.mulf %21, %22 : vector<8x1xf32>
    %24 = vector.broadcast %17 : vector<1x128xf32> to vector<8x128xf32>
    %25 = arith.mulf %10, %24 : vector<8x128xf32>
    %cst_10 = arith.constant dense<0.000000e+00> : vector<8xf32>
    %26 = vector.multi_reduction <add>, %25, %cst_10 [1] : vector<8x128xf32> to vector<8xf32>
    %27 = vector.shape_cast %26 : vector<8xf32> to vector<8x1xf32>
    %cst_11 = arith.constant 1.562500e-02 : f32
    %28 = vector.broadcast %cst_11 : f32 to vector<8x1xf32>
    %29 = arith.mulf %27, %28 : vector<8x1xf32>
    %30 = vector.broadcast %15 : vector<1x128xf32> to vector<8x128xf32>
    %31 = vector.broadcast %23 : vector<8x1xf32> to vector<8x128xf32>
    %32 = arith.mulf %30, %31 : vector<8x128xf32>
    %33 = vector.broadcast %17 : vector<1x128xf32> to vector<8x128xf32>
    %34 = vector.broadcast %29 : vector<8x1xf32> to vector<8x128xf32>
    %35 = arith.mulf %33, %34 : vector<8x128xf32>
    %36 = arith.addf %32, %35 : vector<8x128xf32>
    %37 = arith.subf %10, %36 : vector<8x128xf32>
    %38 = arith.mulf %37, %37 : vector<8x128xf32>
    %39 = vector.broadcast %15 : vector<1x128xf32> to vector<8x128xf32>
    %40 = arith.mulf %38, %39 : vector<8x128xf32>
    %cst_12 = arith.constant dense<0.000000e+00> : vector<8xf32>
    %41 = vector.multi_reduction <add>, %40, %cst_12 [1] : vector<8x128xf32> to vector<8xf32>
    %42 = vector.shape_cast %41 : vector<8xf32> to vector<8x1xf32>
    %cst_13 = arith.constant 1.562500e-02 : f32
    %43 = vector.broadcast %cst_13 : f32 to vector<8x1xf32>
    %44 = arith.mulf %42, %43 : vector<8x1xf32>
    %45 = vector.broadcast %17 : vector<1x128xf32> to vector<8x128xf32>
    %46 = arith.mulf %38, %45 : vector<8x128xf32>
    %cst_14 = arith.constant dense<0.000000e+00> : vector<8xf32>
    %47 = vector.multi_reduction <add>, %46, %cst_14 [1] : vector<8x128xf32> to vector<8xf32>
    %48 = vector.shape_cast %47 : vector<8xf32> to vector<8x1xf32>
    %cst_15 = arith.constant 1.562500e-02 : f32
    %49 = vector.broadcast %cst_15 : f32 to vector<8x1xf32>
    %50 = arith.mulf %48, %49 : vector<8x1xf32>
    %cst_16 = arith.constant 9.99999974E-6 : f32
    %51 = vector.broadcast %cst_16 : f32 to vector<8x1xf32>
    %52 = arith.addf %44, %51 : vector<8x1xf32>
    %53 = math.rsqrt %52 : vector<8x1xf32>
    %54 = vector.broadcast %15 : vector<1x128xf32> to vector<8x128xf32>
    %55 = vector.broadcast %53 : vector<8x1xf32> to vector<8x128xf32>
    %56 = arith.mulf %54, %55 : vector<8x128xf32>
    %cst_17 = arith.constant 9.99999974E-6 : f32
    %57 = vector.broadcast %cst_17 : f32 to vector<8x1xf32>
    %58 = arith.addf %50, %57 : vector<8x1xf32>
    %59 = math.rsqrt %58 : vector<8x1xf32>
    %60 = vector.broadcast %17 : vector<1x128xf32> to vector<8x128xf32>
    %61 = vector.broadcast %59 : vector<8x1xf32> to vector<8x128xf32>
    %62 = arith.mulf %60, %61 : vector<8x128xf32>
    %63 = arith.addf %56, %62 : vector<8x128xf32>
    %64 = arith.mulf %37, %63 : vector<8x128xf32>
    %c0_18 = arith.constant 0 : index
    %c0_19 = arith.constant 0 : index
    %65 = vector.load %arg4[%c0_18, %c0_19] : memref<1x128xf32, #tpu.memory_space<vmem>>, vector<1x128xf32>
    %66 = vector.broadcast %65 : vector<1x128xf32> to vector<8x128xf32>
    %67 = arith.mulf %64, %66 : vector<8x128xf32>
    %c0_20 = arith.constant 0 : index
    %c0_21 = arith.constant 0 : index
    %68 = vector.load %arg5[%c0_20, %c0_21] : memref<1x128xf32, #tpu.memory_space<vmem>>, vector<1x128xf32>
    %69 = vector.broadcast %68 : vector<1x128xf32> to vector<8x128xf32>
    %70 = arith.addf %67, %69 : vector<8x128xf32>
    %c0_22 = arith.constant 0 : index
    %c0_23 = arith.constant 0 : index
    %71 = vector.load %arg6[%c0_22, %c0_23] : memref<128x4xf32, #tpu.memory_space<vmem>>, vector<128x4xf32>
    %cst_24 = arith.constant dense<0.000000e+00> : vector<8x4xf32>
    %72 = tpu.matmul %70, %71, %cst_24 {dimension_numbers = #tpu.dot_dimension_numbers<[1], [0], [0], [1], [0, 0, 1, 1], [], []>} : vector<8x128xf32>, vector<128x4xf32>, vector<8x4xf32> -> vector<8x4xf32>
    %c0_25 = arith.constant 0 : index
    %c0_26 = arith.constant 0 : index
    %73 = vector.load %arg7[%c0_25, %c0_26] : memref<1x4xf32, #tpu.memory_space<vmem>>, vector<1x4xf32>
    %74 = vector.broadcast %73 : vector<1x4xf32> to vector<8x4xf32>
    %75 = arith.addf %72, %74 : vector<8x4xf32>
    %c0_27 = arith.constant 0 : index
    %c0_28 = arith.constant 0 : index
    %76 = vector.load %arg8[%c0_27, %c0_28] : memref<8x4xf32, #tpu.memory_space<vmem>>, vector<8x4xf32>
    tpu.vector_store %arg8[%c0_27, %c0_28], %75 {strides = array<i32>} : memref<8x4xf32, #tpu.memory_space<vmem>>, vector<8x4xf32>,
    return
  }
  func.func @transform_0(%arg0: i32) -> (i32, i32) {
    %c0_i32 = arith.constant 0 : i32
    %c0_i32_0 = arith.constant 0 : i32
    return %arg0, %c0_i32 : i32, i32
  }
  func.func @transform_1(%arg0: i32) -> (i32, i32) {
    %c0_i32 = arith.constant 0 : i32
    %c0_i32_0 = arith.constant 0 : i32
    %c0_i32_1 = arith.constant 0 : i32
    return %c0_i32, %c0_i32_0 : i32, i32
  }
  func.func @transform_2(%arg0: i32) -> (i32, i32) {
    %c0_i32 = arith.constant 0 : i32
    %c0_i32_0 = arith.constant 0 : i32
    %c0_i32_1 = arith.constant 0 : i32
    return %c0_i32, %c0_i32_0 : i32, i32
  }
  func.func @transform_3(%arg0: i32) -> (i32, i32) {
    %c0_i32 = arith.constant 0 : i32
    %c0_i32_0 = arith.constant 0 : i32
    %c0_i32_1 = arith.constant 0 : i32
    return %c0_i32, %c0_i32_0 : i32, i32
  }
  func.func @transform_4(%arg0: i32) -> (i32, i32) {
    %c0_i32 = arith.constant 0 : i32
    %c0_i32_0 = arith.constant 0 : i32
    %c0_i32_1 = arith.constant 0 : i32
    return %c0_i32, %c0_i32_0 : i32, i32
  }
  func.func @transform_5(%arg0: i32) -> (i32, i32) {
    %c0_i32 = arith.constant 0 : i32
    %c0_i32_0 = arith.constant 0 : i32
    %c0_i32_1 = arith.constant 0 : i32
    return %c0_i32, %c0_i32_0 : i32, i32
  }
  func.func @transform_6(%arg0: i32) -> (i32, i32) {
    %c0_i32 = arith.constant 0 : i32
    %c0_i32_0 = arith.constant 0 : i32
    %c0_i32_1 = arith.constant 0 : i32
    return %c0_i32, %c0_i32_0 : i32, i32
  }
  func.func @transform_7(%arg0: i32) -> (i32, i32) {
    %c0_i32 = arith.constant 0 : i32
    %c0_i32_0 = arith.constant 0 : i32
    return %arg0, %c0_i32 : i32, i32
  }
}

</mosaic_0001>

<llo_original>
// kernel: tpu_custom_call.1
$region0: #{tpu_custom_call.1}
  #allocation0 [shape = 'u32[]', space=smem, size = 0x4, offset = 0x4, fixed_abs, tag = 'smem constant byte address 0x4 - core index']
  #allocation1 [shape = 'u32[144,128]{1,0:T(1,128)}', space=vmem, size = 0x12000, scoped, tag = 'internal scratch']
  %s0 = inlined_call_operand.vmem [shape: f32[16,10], index: 0, kind: input, shape index: {}]
  %s1 = inlined_call_operand.vmem [shape: f32[10,128], index: 1, kind: input, shape index: {}]
  %s2 = inlined_call_operand.vmem [shape: f32[1,128], index: 2, kind: input, shape index: {}]
  %s3 = inlined_call_operand.vmem [shape: f32[1,128], index: 3, kind: input, shape index: {}]
  %s4 = inlined_call_operand.vmem [shape: f32[1,128], index: 4, kind: input, shape index: {}]
  %s5 = inlined_call_operand.vmem [shape: f32[128,4], index: 5, kind: input, shape index: {}]
  %s6 = inlined_call_operand.vmem [shape: f32[1,4], index: 6, kind: input, shape index: {}]
  %s7 = inlined_call_operand.vmem [shape: f32[16,4], index: 7, kind: output, shape index: {}]
  %s8 = sld [smem:[#allocation0]]
  $region61: #{tpu_custom_call.1} parent=0
    _
  %s10 = ssub.s32 1, %s8
  %s11 = scalar_select 0, %s10, %s8
  loop: start=0, step=1, limit=4
  $region2: #{tpu_custom_call.1} parent=0 // loop_pre_header
    _
  $region3: #{tpu_custom_call.1} parent=0 // loop_header
    %s13 = sphi 0, %s17
    %p14 = scmp.ge.s32.totalorder %s13, 4
    %s23 = sphi 0, %s25
    %s26 = sphi 0, %s23
    %s27 = sphi 0, %s26
    %s43 = sphi 0, %s27
    %s47 = sphi 0, %s47
    %s49 = sphi 0, %s47
    %s50 = sphi 0, %s49
    %s64 = sphi 0, %s50
    %s68 = sphi 0, %s68
    %s70 = sphi 0, %s68
    %s71 = sphi 0, %s70
    %s85 = sphi 0, %s71
    %s89 = sphi 0, %s89
    %s91 = sphi 0, %s89
    %s92 = sphi 0, %s91
    %s106 = sphi 0, %s92
    %s110 = sphi 0, %s110
    %s112 = sphi 0, %s110
    %s113 = sphi 0, %s112
    %s127 = sphi 0, %s113
    %s131 = sphi 0, %s131
    %s133 = sphi 0, %s131
    %s134 = sphi 0, %s133
    %s148 = sphi 0, %s134
    %s152 = sphi 0, %s152
    %s154 = sphi 0, %s152
    %s155 = sphi 0, %s154
    %s169 = sphi 0, %s155
    %s175 = sphi 0, %s177
    %s178 = sphi 0, %s175
    %s179 = sphi 0, %s178
    %s195 = sphi 0, %s179
  $region4: #{tpu_custom_call.1} parent=0 // loop_header_branch
    %16 = sbr.rel (%p14) target = $region8
  $region5: #{tpu_custom_call.1} parent=0 // loop_body
    %s18 = ssub.s32 %s13, 1
    %s19 = ssub.s32 %s13, 2
    %s20 = sadd.s32 %s13, 1
    %s21 = ssub.s32 %s13, %s20
    %p22 = scmp.eq.s32.totalorder %s21, 0
    %s24 = sadd.s32 %s23, 1
    %s25 = scalar_select %p22, %s23, %s24
    %p28 = pneg %p22
    %p29 = scmp.eq.s32.totalorder %s13, 1
    %p30 = por %p28, %p29
    %p31 = scmp.ne.s32.totalorder %s23, %s26
    %p32 = scmp.eq.s32.totalorder %s13, 0
    %p33 = por %p31, %p32
    %p34 = scmp.ne.s32.totalorder %s23, %s26
    %p35 = scmp.eq.s32.totalorder %s18, 1
    %p36 = por %p34, %p35
    %p37 = scmp.ne.s32.totalorder %s26, %s27
    %p38 = scmp.eq.s32.totalorder %s18, 0
    %p39 = por %p37, %p38
    %p40 = scmp.ne.s32.totalorder %s26, %s27
    %p41 = scmp.eq.s32.totalorder %s19, 1
    %p42 = por %p40, %p41
    %p44 = scmp.ne.s32.totalorder %s27, %s43
    %p45 = scmp.eq.s32.totalorder %s19, 0
    %p46 = por %p44, %p45
    %s48 = sadd.s32 %s47, 1
    %p51 = scmp.eq.s32.totalorder %s13, 1
    %p52 = scmp.ne.s32.totalorder %s47, %s49
    %p53 = scmp.eq.s32.totalorder %s13, 0
    %p54 = por %p52, %p53
    %p55 = scmp.ne.s32.totalorder %s47, %s49
    %p56 = scmp.eq.s32.totalorder %s18, 1
    %p57 = por %p55, %p56
    %p58 = scmp.ne.s32.totalorder %s49, %s50
    %p59 = scmp.eq.s32.totalorder %s18, 0
    %p60 = por %p58, %p59
    %p61 = scmp.ne.s32.totalorder %s49, %s50
    %p62 = scmp.eq.s32.totalorder %s19, 1
    %p63 = por %p61, %p62
    %p65 = scmp.ne.s32.totalorder %s50, %s64
    %p66 = scmp.eq.s32.totalorder %s19, 0
    %p67 = por %p65, %p66
    %s69 = sadd.s32 %s68, 1
    %p72 = scmp.eq.s32.totalorder %s13, 1
    %p73 = scmp.ne.s32.totalorder %s68, %s70
    %p74 = scmp.eq.s32.totalorder %s13, 0
    %p75 = por %p73, %p74
    %p76 = scmp.ne.s32.totalorder %s68, %s70
    %p77 = scmp.eq.s32.totalorder %s18, 1
    %p78 = por %p76, %p77
    %p79 = scmp.ne.s32.totalorder %s70, %s71
    %p80 = scmp.eq.s32.totalorder %s18, 0
    %p81 = por %p79, %p80
    %p82 = scmp.ne.s32.totalorder %s70, %s71
    %p83 = scmp.eq.s32.totalorder %s19, 1
    %p84 = por %p82, %p83
    %p86 = scmp.ne.s32.totalorder %s71, %s85
    %p87 = scmp.eq.s32.totalorder %s19, 0
    %p88 = por %p86, %p87
    %s90 = sadd.s32 %s89, 1
    %p93 = scmp.eq.s32.totalorder %s13, 1
    %p94 = scmp.ne.s32.totalorder %s89, %s91
    %p95 = scmp.eq.s32.totalorder %s13, 0
    %p96 = por %p94, %p95
    %p97 = scmp.ne.s32.totalorder %s89, %s91
    %p98 = scmp.eq.s32.totalorder %s18, 1
    %p99 = por %p97, %p98
    %p100 = scmp.ne.s32.totalorder %s91, %s92
    %p101 = scmp.eq.s32.totalorder %s18, 0
    %p102 = por %p100, %p101
    %p103 = scmp.ne.s32.totalorder %s91, %s92
    %p104 = scmp.eq.s32.totalorder %s19, 1
    %p105 = por %p103, %p104
    %p107 = scmp.ne.s32.totalorder %s92, %s106
    %p108 = scmp.eq.s32.totalorder %s19, 0
    %p109 = por %p107, %p108
    %s111 = sadd.s32 %s110, 1
    %p114 = scmp.eq.s32.totalorder %s13, 1
    %p115 = scmp.ne.s32.totalorder %s110, %s112
    %p116 = scmp.eq.s32.totalorder %s13, 0
    %p117 = por %p115, %p116
    %p118 = scmp.ne.s32.totalorder %s110, %s112
    %p119 = scmp.eq.s32.totalorder %s18, 1
    %p120 = por %p118, %p119
    %p121 = scmp.ne.s32.totalorder %s112, %s113
    %p122 = scmp.eq.s32.totalorder %s18, 0
    %p123 = por %p121, %p122
    %p124 = scmp.ne.s32.totalorder %s112, %s113
    %p125 = scmp.eq.s32.totalorder %s19, 1
    %p126 = por %p124, %p125
    %p128 = scmp.ne.s32.totalorder %s113, %s127
    %p129 = scmp.eq.s32.totalorder %s19, 0
    %p130 = por %p128, %p129
    %s132 = sadd.s32 %s131, 1
    %p135 = scmp.eq.s32.totalorder %s13, 1
    %p136 = scmp.ne.s32.totalorder %s131, %s133
    %p137 = scmp.eq.s32.totalorder %s13, 0
    %p138 = por %p136, %p137
    %p139 = scmp.ne.s32.totalorder %s131, %s133
    %p140 = scmp.eq.s32.totalorder %s18, 1
    %p141 = por %p139, %p140
    %p142 = scmp.ne.s32.totalorder %s133, %s134
    %p143 = scmp.eq.s32.totalorder %s18, 0
    %p144 = por %p142, %p143
    %p145 = scmp.ne.s32.totalorder %s133, %s134
    %p146 = scmp.eq.s32.totalorder %s19, 1
    %p147 = por %p145, %p146
    %p149 = scmp.ne.s32.totalorder %s134, %s148
    %p150 = scmp.eq.s32.totalorder %s19, 0
    %p151 = por %p149, %p150
    %s153 = sadd.s32 %s152, 1
    %p156 = scmp.eq.s32.totalorder %s13, 1
    %p157 = scmp.ne.s32.totalorder %s152, %s154
    %p158 = scmp.eq.s32.totalorder %s13, 0
    %p159 = por %p157, %p158
    %p160 = scmp.ne.s32.totalorder %s152, %s154
    %p161 = scmp.eq.s32.totalorder %s18, 1
    %p162 = por %p160, %p161
    %p163 = scmp.ne.s32.totalorder %s154, %s155
    %p164 = scmp.eq.s32.totalorder %s18, 0
    %p165 = por %p163, %p164
    %p166 = scmp.ne.s32.totalorder %s154, %s155
    %p167 = scmp.eq.s32.totalorder %s19, 1
    %p168 = por %p166, %p167
    %p170 = scmp.ne.s32.totalorder %s155, %s169
    %p171 = scmp.eq.s32.totalorder %s19, 0
    %p172 = por %p170, %p171
    %s173 = ssub.s32 %s13, %s20
    %p174 = scmp.eq.s32.totalorder %s173, 0
    %s176 = sadd.s32 %s175, 1
    %s177 = scalar_select %p174, %s175, %s176
    %p180 = pneg %p174
    %p181 = scmp.eq.s32.totalorder %s13, 1
    %p182 = por %p180, %p181
    %p183 = scmp.ne.s32.totalorder %s175, %s178
    %p184 = scmp.eq.s32.totalorder %s13, 0
    %p185 = por %p183, %p184
    %p186 = scmp.ne.s32.totalorder %s175, %s178
    %p187 = scmp.eq.s32.totalorder %s18, 1
    %p188 = por %p186, %p187
    %p189 = scmp.ne.s32.totalorder %s178, %s179
    %p190 = scmp.eq.s32.totalorder %s18, 0
    %p191 = por %p189, %p190
    %p192 = scmp.ne.s32.totalorder %s178, %s179
    %p193 = scmp.eq.s32.totalorder %s19, 1
    %p194 = por %p192, %p193
    %p196 = scmp.ne.s32.totalorder %s179, %s195
    %p197 = scmp.eq.s32.totalorder %s19, 0
    %p198 = por %p196, %p197
    %p199 = scmp.le.s32.totalorder 1, %s13
    %p200 = scmp.lt.s32.totalorder %s13, 3
    %p201 = pnand %p199, %p200
    %p202 = pneg %p201
    // Predicated region
    $region9: #{tpu_custom_call.1} parent=5 // pred_check
      _
    $region10: #{tpu_custom_call.1} parent=5 // pred_check_branch
      %204 = sbr.rel (%p201) target = $region12
    $region11: #{tpu_custom_call.1} parent=5 // pred_region
      %s205 = ssub.s32 %s13, 1
      // Predicated region
      $region13: #{tpu_custom_call.1} parent=11 // pred_check
        %p206 = pneg %p60
      $region14: #{tpu_custom_call.1} parent=11 // pred_check_branch
        %208 = sbr.rel (%p206) target = $region16
      $region15: #{tpu_custom_call.1} parent=11 // pred_region
        _
      $region16: #{tpu_custom_call.1} parent=11 // pred_fallthru
        _
      // Predicated region
      $region17: #{tpu_custom_call.1} parent=11 // pred_check
        %p209 = pneg %p81
      $region18: #{tpu_custom_call.1} parent=11 // pred_check_branch
        %211 = sbr.rel (%p209) target = $region20
      $region19: #{tpu_custom_call.1} parent=11 // pred_region
        _
      $region20: #{tpu_custom_call.1} parent=11 // pred_fallthru
        _
      // Predicated region
      $region21: #{tpu_custom_call.1} parent=11 // pred_check
        %p212 = pneg %p102
      $region22: #{tpu_custom_call.1} parent=11 // pred_check_branch
        %214 = sbr.rel (%p212) target = $region24
      $region23: #{tpu_custom_call.1} parent=11 // pred_region
        _
      $region24: #{tpu_custom_call.1} parent=11 // pred_fallthru
        _
      // Predicated region
      $region25: #{tpu_custom_call.1} parent=11 // pred_check
        %p215 = pneg %p123
      $region26: #{tpu_custom_call.1} parent=11 // pred_check_branch
        %217 = sbr.rel (%p215) target = $region28
      $region27: #{tpu_custom_call.1} parent=11 // pred_region
        _
      $region28: #{tpu_custom_call.1} parent=11 // pred_fallthru
        _
      // Predicated region
      $region29: #{tpu_custom_call.1} parent=11 // pred_check
        %p218 = pneg %p144
      $region30: #{tpu_custom_call.1} parent=11 // pred_check_branch
        %220 = sbr.rel (%p218) target = $region32
      $region31: #{tpu_custom_call.1} parent=11 // pred_region
        _
      $region32: #{tpu_custom_call.1} parent=11 // pred_fallthru
        _
      // Predicated region
      $region33: #{tpu_custom_call.1} parent=11 // pred_check
        %p221 = pneg %p165
      $region34: #{tpu_custom_call.1} parent=11 // pred_check_branch
        %223 = sbr.rel (%p221) target = $region36
      $region35: #{tpu_custom_call.1} parent=11 // pred_region
        _
      $region36: #{tpu_custom_call.1} parent=11 // pred_fallthru
        _
    $region12: #{tpu_custom_call.1} parent=5 // pred_fallthru
      _
    %p224 = scmp.lt.s32.totalorder %s13, 2
    // Predicated region
    $region37: #{tpu_custom_call.1} parent=5 // pred_check
      %p225 = pneg %p224
    $region38: #{tpu_custom_call.1} parent=5 // pred_check_branch
      %227 = sbr.rel (%p225) target = $region40
    $region39: #{tpu_custom_call.1} parent=5 // pred_region
      // Predicated region
      $region41: #{tpu_custom_call.1} parent=39 // pred_check
        %p228 = pneg %p33
      $region42: #{tpu_custom_call.1} parent=39 // pred_check_branch
        %230 = sbr.rel (%p228) target = $region44
      $region43: #{tpu_custom_call.1} parent=39 // pred_region
        %p231 = scmp.lt.s32.totalorder %s13, 1
        %s232 = scalar_select %p231, %s13, 1
        %s233 = smul.addr %s232, 8
        %s234 = scalar_lea.vmem %s0, %s233
      $region44: #{tpu_custom_call.1} parent=39 // pred_fallthru
        _
    $region40: #{tpu_custom_call.1} parent=5 // pred_fallthru
      _
    %p235 = scmp.le.s32.totalorder 1, %s13
    %p236 = scmp.lt.s32.totalorder %s13, 3
    %p237 = pnand %p235, %p236
    %p238 = pneg %p237
    // Predicated region
    $region45: #{tpu_custom_call.1} parent=5 // pred_check
      _
    $region46: #{tpu_custom_call.1} parent=5 // pred_check_branch
      %240 = sbr.rel (%p237) target = $region48
    $region47: #{tpu_custom_call.1} parent=5 // pred_region
      %s241 = ssub.s32 %s13, 1
      %p242 = scmp.lt.s32.totalorder %s18, 1
      %s243 = scalar_select %p242, %s18, 1
      %s244 = smul.addr %s243, 8
      %s245 = scalar_lea.vmem %s0, %s244
      %p246 = pneg %p39
      %p247 = pneg %p36
      %p248 = pneg %p60
      %p249 = pneg %p57
      %p250 = pneg %p81
      %p251 = pneg %p78
      %p252 = pneg %p102
      %p253 = pneg %p99
      %p254 = pneg %p123
      %p255 = pneg %p120
      %p256 = pneg %p144
      %p257 = pneg %p141
      %p258 = pneg %p165
      %p259 = pneg %p162
      %p260 = pneg %p191
      %p261 = pneg %p188
      %p262 = scmp.lt.s32.totalorder %s18, 1
      %s263 = scalar_select %p262, %s18, 1
      %s264 = smul.addr %s263, 8
      %s265 = scalar_lea.vmem %s7, %s264
      %p266 = scmp.lt.s32.totalorder %s18, 1
      %s267 = scalar_select %p266, %s18, 1
      %s268 = smul.addr %s267, 8
      %s269 = scalar_lea.vmem %s0, %s268
      %p270 = scmp.lt.s32.totalorder %s18, 1
      %s271 = scalar_select %p270, %s18, 1
      %s272 = smul.addr %s271, 8
      %s273 = scalar_lea.vmem %s7, %s272
      %v274 = vld [vmem:[%s269] sm:$0xff]
      %v275 = vld [vmem:[%s1] sm:$0xff]
      %v276 = vld [vmem:[%s1 + $0x8] sm:$0x3]
      %v277 = vld [vmem:[%s2] sm:$0x1]
      %v279 = vlaneseq
      %v280 = vshrl.u32 %v279, 7
      %v281 = vsub.s32 0, %v280
      %v282 = vrot.slane %v277, %v281
      %vm284 = vcmask 80896
      %v286 = vsel %vm284, %v274, 0
      %vm288 = vcmask 1041408
      %v290 = vsel %vm288, %v276, 0
      %292 = vmatprep.subr.mxu0 0.0
      %293 = vmatpush1.msra.mxu0 %v275
      %294 = vmatprep.subr.mxu0 0.0
      %295 = vmatpush1.msra.mxu0 %v290
      %296 = vmatprep.subr.mxu0 0.0
      %297 = vmatpush1.msra.mxu0 0.0
      %298 = vmatprep.subr.mxu0 0.0
      %299 = vmatpush1.msra.mxu0 0.0
      %300 = vmatprep.subr.mxu0 0.0
      %301 = vmatpush1.msra.mxu0 0.0
      %302 = vmatprep.subr.mxu0 0.0
      %303 = vmatpush1.msra.mxu0 0.0
      %304 = vmatprep.subr.mxu0 0.0
      %305 = vmatpush1.msra.mxu0 0.0
      %306 = vmatprep.subr.mxu0 0.0
      %307 = vmatpush1.msra.mxu0 0.0
      %308 = vmatprep.subr.mxu0 0.0
      %309 = vmatpush1.msra.mxu0 0.0
      %310 = vmatprep.subr.mxu0 0.0
      %311 = vmatpush1.msra.mxu0 0.0
      %312 = vmatprep.subr.mxu0 0.0
      %313 = vmatpush1.msra.mxu0 0.0
      %314 = vmatprep.subr.mxu0 0.0
      %315 = vmatpush1.msra.mxu0 0.0
      %316 = vmatprep.subr.mxu0 0.0
      %317 = vmatpush1.msra.mxu0 0.0
      %318 = vmatprep.subr.mxu0 0.0
      %319 = vmatpush1.msra.mxu0 0.0
      %320 = vmatprep.subr.mxu0 0.0
      %321 = vmatpush1.msra.mxu0 0.0
      %322 = vmatprep.subr.mxu0 0.0
      %323 = vmatpush1.msra.mxu0 0.0
      %324 = vmatprep.subr.mxu0 0.0
      %325 = vmatpush1.msra.mxu0 0.0
      %326 = vmatprep.subr.mxu0 0.0
      %327 = vmatpush1.msra.mxu0 0.0
      %328 = vmatprep.subr.mxu0 0.0
      %329 = vmatpush1.msra.mxu0 0.0
      %330 = vmatprep.subr.mxu0 0.0
      %331 = vmatpush1.msra.mxu0 0.0
      %332 = vmatprep.subr.mxu0 0.0
      %333 = vmatpush1.msra.mxu0 0.0
      %334 = vmatprep.subr.mxu0 0.0
      %335 = vmatpush1.msra.mxu0 0.0
      %336 = vmatprep.subr.mxu0 0.0
      %337 = vmatpush1.msra.mxu0 0.0
      %338 = vmatprep.subr.mxu0 0.0
      %339 = vmatpush1.msra.mxu0 0.0
      %340 = vmatprep.subr.mxu0 0.0
      %341 = vmatpush1.msra.mxu0 0.0
      %342 = vmatprep.subr.mxu0 0.0
      %343 = vmatpush1.msra.mxu0 0.0
      %344 = vmatprep.subr.mxu0 0.0
      %345 = vmatpush1.msra.mxu0 0.0
      %346 = vmatprep.subr.mxu0 0.0
      %347 = vmatpush1.msra.mxu0 0.0
      %348 = vmatprep.subr.mxu0 0.0
      %349 = vmatpush1.msra.mxu0 0.0
      %350 = vmatprep.subr.mxu0 0.0
      %351 = vmatpush1.msra.mxu0 0.0
      %352 = vmatprep.subr.mxu0 0.0
      %353 = vmatpush1.msra.mxu0 0.0
      %354 = vmatprep.subr.mxu0 0.0
      %355 = vmatpush1.msra.mxu0 0.0
      %356 = vmatprep.mubr.f32.mxu0 0.0
      %357 = vmatmul.mubr.f32.gmra.mrb[0].mxu0 %v286
      %v358 = vpop.f32.mrb[0].mxu0
      %v359 = vadd.f32 %v282, %v358
      %v360 = vpop.f32.mrb[0].mxu0
      %361 = vdwg.mxu0
      %vm362 = vcmp.ge.f32.partialorder %v359, 0.0
      %v363 = vmul.f32 %v359, 0.01
      %v364 = vsel %vm362, %v359, %v363
      %v365 = vlaneseq
      %v366 = vand.u32 %v365, 127
      %vm367 = vcmp.lt.s32.totalorder %v366, 64
      %v368 = vsel %vm367, 1, 0
      %v369 = vcvt.s32.f32 %v368
      %v370 = vsub.f32 1.0, %v369
      %v371 = vmul.f32 %v364, %v369
      %372 = vadd.xlane.f32.xlu0 %v371
      %v373 = vpop.xlane.xlu0 %372
      %v374 = vmul.f32 %v373, 0.015625
      %v375 = vmul.f32 %v364, %v370
      %376 = vadd.xlane.f32.xlu0 %v375
      %v377 = vpop.xlane.xlu0 %376
      %v378 = vmul.f32 %v377, 0.015625
      %v379 = vmul.f32 %v369, %v374
      %v380 = vmul.f32 %v370, %v378
      %v381 = vadd.f32 %v379, %v380
      %v382 = vsub.f32 %v364, %v381
      %v383 = vmul.f32 %v382, %v382
      %v384 = vmul.f32 %v383, %v369
      %385 = vadd.xlane.f32.xlu0 %v384
      %v386 = vpop.xlane.xlu0 %385
      %v387 = vmul.f32 %v386, 0.015625
      %v388 = vmul.f32 %v383, %v370
      %389 = vadd.xlane.f32.xlu0 %v388
      %v390 = vpop.xlane.xlu0 %389
      %v391 = vmul.f32 %v390, 0.015625
      %v392 = vadd.f32 %v387, 1e-05
      %v393 = vrsqrt.pop %v392
      %v394 = vmul.f32 %v369, %v393
      %v395 = vadd.f32 %v391, 1e-05
      %v396 = vrsqrt.pop %v395
      %v397 = vmul.f32 %v370, %v396
      %v398 = vadd.f32 %v394, %v397
      %v399 = vmul.f32 %v382, %v398
      %v400 = vld [vmem:[%s3] sm:$0x1]
      %v402 = vlaneseq
      %v403 = vshrl.u32 %v402, 7
      %v404 = vsub.s32 0, %v403
      %v405 = vrot.slane %v400, %v404
      %v407 = vmul.f32 %v399, %v405
      %v408 = vld [vmem:[%s4] sm:$0x1]
      %v410 = vlaneseq
      %v411 = vshrl.u32 %v410, 7
      %v412 = vsub.s32 0, %v411
      %v413 = vrot.slane %v408, %v412
      %v415 = vadd.f32 %v407, %v413
      %v416 = vld [vmem:[%s5] sm:$0xff]
      %v417 = vld [vmem:[%s5 + $0x8] sm:$0xff]
      %v418 = vld [vmem:[%s5 + $0x10] sm:$0xff]
      %v419 = vld [vmem:[%s5 + $0x18] sm:$0xff]
      %v420 = vld [vmem:[%s5 + $0x20] sm:$0xff]
      %v421 = vld [vmem:[%s5 + $0x28] sm:$0xff]
      %v422 = vld [vmem:[%s5 + $0x30] sm:$0xff]
      %v423 = vld [vmem:[%s5 + $0x38] sm:$0xff]
      %v424 = vld [vmem:[%s5 + $0x40] sm:$0xff]
      %v425 = vld [vmem:[%s5 + $0x48] sm:$0xff]
      %v426 = vld [vmem:[%s5 + $0x50] sm:$0xff]
      %v427 = vld [vmem:[%s5 + $0x58] sm:$0xff]
      %v428 = vld [vmem:[%s5 + $0x60] sm:$0xff]
      %v429 = vld [vmem:[%s5 + $0x68] sm:$0xff]
      %v430 = vld [vmem:[%s5 + $0x70] sm:$0xff]
      %v431 = vld [vmem:[%s5 + $0x78] sm:$0xff]
      %v432 = vld [vmem:[%s6] sm:$0x1]
      %v434 = vlaneseq
      %v435 = vshrl.u32 %v434, 7
      %v436 = vsub.s32 0, %v435
      %v437 = vrot.slane %v432, %v436
      %439 = vmatprep.subr.mxu0 0.0
      %440 = vmatpush1.msra.mxu0 %v416
      %441 = vmatprep.subr.mxu0 0.0
      %442 = vmatpush1.msra.mxu0 %v417
      %443 = vmatprep.subr.mxu0 0.0
      %444 = vmatpush1.msra.mxu0 %v418
      %445 = vmatprep.subr.mxu0 0.0
      %446 = vmatpush1.msra.mxu0 %v419
      %447 = vmatprep.subr.mxu0 0.0
      %448 = vmatpush1.msra.mxu0 %v420
      %449 = vmatprep.subr.mxu0 0.0
      %450 = vmatpush1.msra.mxu0 %v421
      %451 = vmatprep.subr.mxu0 0.0
      %452 = vmatpush1.msra.mxu0 %v422
      %453 = vmatprep.subr.mxu0 0.0
      %454 = vmatpush1.msra.mxu0 %v423
      %455 = vmatprep.subr.mxu0 0.0
      %456 = vmatpush1.msra.mxu0 %v424
      %457 = vmatprep.subr.mxu0 0.0
      %458 = vmatpush1.msra.mxu0 %v425
      %459 = vmatprep.subr.mxu0 0.0
      %460 = vmatpush1.msra.mxu0 %v426
      %461 = vmatprep.subr.mxu0 0.0
      %462 = vmatpush1.msra.mxu0 %v427
      %463 = vmatprep.subr.mxu0 0.0
      %464 = vmatpush1.msra.mxu0 %v428
      %465 = vmatprep.subr.mxu0 0.0
      %466 = vmatpush1.msra.mxu0 %v429
      %467 = vmatprep.subr.mxu0 0.0
      %468 = vmatpush1.msra.mxu0 %v430
      %469 = vmatprep.subr.mxu0 0.0
      %470 = vmatpush1.msra.mxu0 %v431
      %471 = vmatprep.subr.mxu0 0.0
      %472 = vmatpush1.msra.mxu0 0.0
      %473 = vmatprep.subr.mxu0 0.0
      %474 = vmatpush1.msra.mxu0 0.0
      %475 = vmatprep.subr.mxu0 0.0
      %476 = vmatpush1.msra.mxu0 0.0
      %477 = vmatprep.subr.mxu0 0.0
      %478 = vmatpush1.msra.mxu0 0.0
      %479 = vmatprep.subr.mxu0 0.0
      %480 = vmatpush1.msra.mxu0 0.0
      %481 = vmatprep.subr.mxu0 0.0
      %482 = vmatpush1.msra.mxu0 0.0
      %483 = vmatprep.subr.mxu0 0.0
      %484 = vmatpush1.msra.mxu0 0.0
      %485 = vmatprep.subr.mxu0 0.0
      %486 = vmatpush1.msra.mxu0 0.0
      %487 = vmatprep.subr.mxu0 0.0
      %488 = vmatpush1.msra.mxu0 0.0
      %489 = vmatprep.subr.mxu0 0.0
      %490 = vmatpush1.msra.mxu0 0.0
      %491 = vmatprep.subr.mxu0 0.0
      %492 = vmatpush1.msra.mxu0 0.0
      %493 = vmatprep.subr.mxu0 0.0
      %494 = vmatpush1.msra.mxu0 0.0
      %495 = vmatprep.subr.mxu0 0.0
      %496 = vmatpush1.msra.mxu0 0.0
      %497 = vmatprep.subr.mxu0 0.0
      %498 = vmatpush1.msra.mxu0 0.0
      %499 = vmatprep.subr.mxu0 0.0
      %500 = vmatpush1.msra.mxu0 0.0
      %501 = vmatprep.subr.mxu0 0.0
      %502 = vmatpush1.msra.mxu0 0.0
      %503 = vmatprep.mubr.f32.mxu0 0.0
      %504 = vmatmul.mubr.f32.gmra.mrb[0].mxu0 %v415
      %v505 = vpop.f32.mrb[0].mxu0
      %v506 = vadd.f32 %v437, %v505
      %v507 = vpop.f32.mrb[0].mxu0
      %508 = vdwg.mxu0
      %vm509 = vcmask 31744
      %510 = vst.msk [vmem:[%s273] sm:$0xff] %vm509, %v506
      %p511 = scmp.lt.s32.totalorder %s18, 1
      %s512 = scalar_select %p511, %s18, 1
      %s513 = smul.addr %s512, 8
      %s514 = scalar_lea.vmem %s7, %s513
      // Predicated region
      $region49: #{tpu_custom_call.1} parent=47 // pred_check
        %p515 = pneg %p188
      $region50: #{tpu_custom_call.1} parent=47 // pred_check_branch
        %517 = sbr.rel (%p515) target = $region52
      $region51: #{tpu_custom_call.1} parent=47 // pred_region
        _
      $region52: #{tpu_custom_call.1} parent=47 // pred_fallthru
        _
    $region48: #{tpu_custom_call.1} parent=5 // pred_fallthru
      _
    %p518 = scmp.le.s32.totalorder 2, %s13
    // Predicated region
    $region53: #{tpu_custom_call.1} parent=5 // pred_check
      %p519 = pneg %p518
    $region54: #{tpu_custom_call.1} parent=5 // pred_check_branch
      %521 = sbr.rel (%p519) target = $region56
    $region55: #{tpu_custom_call.1} parent=5 // pred_region
      %s522 = ssub.s32 %s13, 2
      // Predicated region
      $region57: #{tpu_custom_call.1} parent=55 // pred_check
        %p523 = pneg %p194
      $region58: #{tpu_custom_call.1} parent=55 // pred_check_branch
        %525 = sbr.rel (%p523) target = $region60
      $region59: #{tpu_custom_call.1} parent=55 // pred_region
        %p526 = scmp.lt.s32.totalorder %s19, 1
        %s527 = scalar_select %p526, %s19, 1
        %s528 = smul.addr %s527, 8
        %s529 = scalar_lea.vmem %s7, %s528
      $region60: #{tpu_custom_call.1} parent=55 // pred_fallthru
        _
    $region56: #{tpu_custom_call.1} parent=5 // pred_fallthru
      _
  $region6: #{tpu_custom_call.1} parent=0 // loop_footer
    %s17 = sadd.s32 1, %s13
  $region7: #{tpu_custom_call.1} parent=0 // loop_footer_branch
    %12 = sbr.rel target = $region3
  $region8: #{tpu_custom_call.1} parent=0 // loop_exit
    _

</llo_original>
